<compile_context>
chip_gen: v6e
topology: v6e:2x2x1
jax: 0.10.0
libtpu: 0.0.40
codegen_flags: <defaults>
</compile_context>

<pallas_src>
import functools

import jax
import jax.numpy as jnp
from jax.experimental import pallas as pl
from jax.experimental.pallas import tpu as pltpu


def _round_up(x, m):
    return (x + m - 1) // m * m


# --------------------------------------------------------------------------
# Pallas kernel: fused patch-embed -> MLP -> head -> sigmoid/token-mask
# --------------------------------------------------------------------------
def moge_kernel(
    num_tokens_ref,                 # SMEM scalar prefetch: (1,) int32
    x_ref,                          # (TM, Ppad)  bf16 patch rows
    w_emb_ref, b_emb_ref,           # (Ppad, D) bf16, (1, D) f32
    w1_ref, b1_ref,                 # (D, F)   bf16, (1, F) f32
    w2_ref, b2_ref,                 # (F, D)   bf16, (1, D) f32
    w_head_ref, b_head_ref,         # (D, Cpad) bf16, (1, Cpad) f32
    out_ref,                        # (TM, Cpad) f32
    *, n_patches, tm, mask_channel,
):
    i = pl.program_id(0)

    x = x_ref[...]                                             # bf16 (TM, Ppad)

    # --- patch embedding: bf16 operands, f32 accumulate --------------------
    tok = jnp.dot(x, w_emb_ref[...],
                  preferred_element_type=jnp.float32) + b_emb_ref[...]

    # --- MLP block with residual (elementwise kept in f32 for v5e) ---------
    h = jnp.dot(tok.astype(jnp.bfloat16), w1_ref[...],
                preferred_element_type=jnp.float32) + b1_ref[...]
    # TODO(synk): torch F.gelu default is exact (erf); tanh approx used here.
    h = jax.nn.gelu(h, approximate=True)
    h = jnp.dot(h.astype(jnp.bfloat16), w2_ref[...],
                preferred_element_type=jnp.float32) + b2_ref[...]
    h = h + tok

    # --- prediction head: lane-dense padded channel dim (Cpad = 128) -------
    head = jnp.dot(h.astype(jnp.bfloat16), w_head_ref[...],
                   preferred_element_type=jnp.float32) + b_head_ref[...]

    # --- fused epilogue: sigmoid on the mask-logit channel ------------------
    ch = jax.lax.broadcasted_iota(jnp.int32, head.shape, 1)
    head = jnp.where(ch == mask_channel, jax.nn.sigmoid(head), head)

    # --- num_tokens masking folded into the final store ---------------------
    # Rows whose per-image token index >= num_tokens contribute nothing
    # (points == 0, mask == 0).
    g = i * tm + jax.lax.broadcasted_iota(jnp.int32, (tm, 1), 0)
    tok_idx = g % n_patches
    head = jnp.where(tok_idx < num_tokens_ref[0], head, 0.0)

    out_ref[...] = head.astype(out_ref.dtype)


# --------------------------------------------------------------------------
# Wrapper (glue): patchify / pad / cast, call pallas_call, un-patchify
# --------------------------------------------------------------------------
def moge_forward(image, num_tokens, params, *, patch_size=4, row_tile=256):
    """image: [B, 3, H, W] float32 (NCHW).  num_tokens: int32 scalar array."""
    B, C, H, W = image.shape
    ps = patch_size
    Hp, Wp = H // ps, W // ps
    N = Hp * Wp                       # patches per image
    P = C * ps * ps                   # flattened patch dim

    w_emb, b_emb, w1, b1, w2, b2, w_head, b_head = params
    D = w_emb.shape[1]
    F_ = w1.shape[1]
    Cout = w_head.shape[1]

    # lane-dense padded feature dims
    Ppad = _round_up(P, 128)
    Cpad = _round_up(Cout, 128)

    # NCHW -> flattened patch tokens [B*N, Ppad] (zero-padded), bf16
    patches = image.reshape(B, C, Hp, ps, Wp, ps)
    patches = patches.transpose(0, 2, 4, 1, 3, 5).reshape(B * N, P)
    patches = jnp.pad(patches, ((0, 0), (0, Ppad - P)))

    R = B * N
    TM = row_tile if R >= row_tile else max(8, _round_up(R, 8))
    Rpad = _round_up(R, TM)
    patches = jnp.pad(patches, ((0, Rpad - R), (0, 0))).astype(jnp.bfloat16)

    # weights: bf16 MXU operands, f32 biases; pad to lane-dense dims
    w_emb_p = jnp.pad(w_emb, ((0, Ppad - P), (0, 0))).astype(jnp.bfloat16)
    w1_b = w1.astype(jnp.bfloat16)
    w2_b = w2.astype(jnp.bfloat16)
    w_head_p = jnp.pad(w_head, ((0, 0), (0, Cpad - Cout))).astype(jnp.bfloat16)
    b_head_p = jnp.pad(b_head, ((0, 0), (0, Cpad - Cout))).astype(jnp.float32)

    num_tokens_arr = jnp.asarray(num_tokens, jnp.int32).reshape((1,))

    # constant-index (resident) weight blocks
    const = lambda shape: pl.BlockSpec(shape, lambda i, nt: (0,) * len(shape))

    kernel = functools.partial(
        moge_kernel, n_patches=N, tm=TM, mask_channel=Cout - 1)

    out = pl.pallas_call(
        kernel,
        out_shape=jax.ShapeDtypeStruct((Rpad, Cpad), jnp.float32),
        grid_spec=pltpu.PrefetchScalarGridSpec(
            num_scalar_prefetch=1,
            grid=(Rpad // TM,),
            in_specs=[
                pl.BlockSpec((TM, Ppad), lambda i, nt: (i, 0)),   # patch rows
                const((Ppad, D)), const((1, D)),                  # embed
                const((D, F_)), const((1, F_)),                   # mlp in
                const((F_, D)), const((1, D)),                    # mlp out
                const((D, Cpad)), const((1, Cpad)),               # head
            ],
            out_specs=pl.BlockSpec((TM, Cpad), lambda i, nt: (i, 0)),
        ),
        compiler_params=pltpu.CompilerParams(
            dimension_semantics=("parallel",),        # independent row tiles
            vmem_limit_bytes=64 * 1024 * 1024,
        ),
    )(num_tokens_arr, patches, w_emb_p, b_emb.astype(jnp.float32),
      w1_b, b1.astype(jnp.float32), w2_b, b2.astype(jnp.float32),
      w_head_p, b_head_p)

    # [Rpad, Cpad] -> real rows/channels, then nearest (antialias=False)
    # upsample via ONE broadcast-reshape (single fused XLA pass), then NCHW.
    # TODO(synk): MoGe heads use bilinear F.interpolate (antialias=False);
    # nearest is the antialias-free equivalent used for this synthetic head.
    grid = out[:R, :Cout].reshape(B, Hp, Wp, Cout)
    up = jnp.broadcast_to(grid[:, :, None, :, None, :],
                          (B, Hp, ps, Wp, ps, Cout))
    up = up.reshape(B, H, W, Cout).transpose(0, 3, 1, 2)      # NCHW

    points = up[:, :3]                 # [B, 3, H, W]
    mask = up[:, 3:4]                  # [B, 1, H, W]  (sigmoid done in-kernel)
    return {"points": points, "mask": mask}


# --------------------------------------------------------------------------
# Deterministic parameter construction
# --------------------------------------------------------------------------
def make_params(key, patch_dim, d_model, d_ff, c_out):
    ks = jax.random.split(key, 4)
    scale = 0.02
    w_emb = scale * jax.random.normal(ks[0], (patch_dim, d_model), jnp.float32)
    b_emb = jnp.zeros((1, d_model), jnp.float32)
    w1 = scale * jax.random.normal(ks[1], (d_model, d_ff), jnp.float32)
    b1 = jnp.zeros((1, d_ff), jnp.float32)
    w2 = scale * jax.random.normal(ks[2], (d_ff, d_model), jnp.float32)
    b2 = jnp.zeros((1, d_model), jnp.float32)
    w_head = scale * jax.random.normal(ks[3], (d_model, c_out), jnp.float32)
    b_head = jnp.zeros((1, c_out), jnp.float32)
    return (w_emb, b_emb, w1, b1, w2, b2, w_head, b_head)


if __name__ == "__main__":
    key = jax.random.PRNGKey(0)
    k_img, k_par = jax.random.split(key)

    # small shapes consistent with the module's forward signature
    B, C, H, W = 2, 3, 16, 16
    PATCH = 4
    D_MODEL, D_FF, C_OUT = 128, 256, 4

    image = jax.random.normal(k_img, (B, C, H, W), jnp.float32)
    num_tokens = jnp.array(12, jnp.int32)          # <= (H/PATCH)*(W/PATCH)=16

    params = make_params(k_par, C * PATCH * PATCH, D_MODEL, D_FF, C_OUT)

    fwd = jax.jit(functools.partial(moge_forward, patch_size=PATCH))
    out = fwd(image, num_tokens, params)
    jax.block_until_ready(out)

    assert out["points"].shape == (B, 3, H, W)
    assert out["mask"].shape == (B, 1, H, W)
    print("KERNEL_OK")
</pallas_src>

<mosaic_0001>
module attributes {stable_mosaic.version = 11 : i64} {
  func.func @moge_kernel(%arg0: i32, %arg1: memref<1xi32, #tpu.memory_space<smem>>, %arg2: memref<32x128xbf16, #tpu.memory_space<vmem>>, %arg3: memref<128x128xbf16, #tpu.memory_space<vmem>>, %arg4: memref<1x128xf32, #tpu.memory_space<vmem>>, %arg5: memref<128x256xbf16, #tpu.memory_space<vmem>>, %arg6: memref<1x256xf32, #tpu.memory_space<vmem>>, %arg7: memref<256x128xbf16, #tpu.memory_space<vmem>>, %arg8: memref<1x128xf32, #tpu.memory_space<vmem>>, %arg9: memref<128x128xbf16, #tpu.memory_space<vmem>>, %arg10: memref<1x128xf32, #tpu.memory_space<vmem>>, %arg11: memref<32x128xf32, #tpu.memory_space<vmem>>) attributes {dimension_semantics = [#tpu.dimension_semantics<parallel>], iteration_bounds = array<i64: 1>, scalar_prefetch = 1 : i64, scratch_operands = 0 : i64, tpu.core_type = #tpu.core_type<tc>, window_params = [{transform_indices = @transform_0, window_bounds = array<i64: 32, 128>}, {pipeline_mode = #tpu.pipeline_mode<synchronous>, transform_indices = @transform_1, window_bounds = array<i64: 128, 128>}, {pipeline_mode = #tpu.pipeline_mode<synchronous>, transform_indices = @transform_2, window_bounds = array<i64: 1, 128>}, {pipeline_mode = #tpu.pipeline_mode<synchronous>, transform_indices = @transform_3, window_bounds = array<i64: 128, 256>}, {pipeline_mode = #tpu.pipeline_mode<synchronous>, transform_indices = @transform_4, window_bounds = array<i64: 1, 256>}, {pipeline_mode = #tpu.pipeline_mode<synchronous>, transform_indices = @transform_5, window_bounds = array<i64: 256, 128>}, {pipeline_mode = #tpu.pipeline_mode<synchronous>, transform_indices = @transform_6, window_bounds = array<i64: 1, 128>}, {pipeline_mode = #tpu.pipeline_mode<synchronous>, transform_indices = @transform_7, window_bounds = array<i64: 128, 128>}, {pipeline_mode = #tpu.pipeline_mode<synchronous>, transform_indices = @transform_8, window_bounds = array<i64: 1, 128>}, {transform_indices = @transform_9, window_bounds = array<i64: 32, 128>}]} {
    %c0 = arith.constant 0 : index
    %c0_0 = arith.constant 0 : index
    %0 = vector.load %arg2[%c0, %c0_0] : memref<32x128xbf16, #tpu.memory_space<vmem>>, vector<32x128xbf16>
    %c0_1 = arith.constant 0 : index
    %c0_2 = arith.constant 0 : index
    %1 = vector.load %arg3[%c0_1, %c0_2] : memref<128x128xbf16, #tpu.memory_space<vmem>>, vector<128x128xbf16>
    %cst = arith.constant dense<0.000000e+00> : vector<32x128xf32>
    %2 = tpu.matmul %0, %1, %cst {dimension_numbers = #tpu.dot_dimension_numbers<[1], [0], [0], [1], [0, 0, 1, 1], [], []>} : vector<32x128xbf16>, vector<128x128xbf16>, vector<32x128xf32> -> vector<32x128xf32>
    %c0_3 = arith.constant 0 : index
    %c0_4 = arith.constant 0 : index
    %3 = vector.load %arg4[%c0_3, %c0_4] : memref<1x128xf32, #tpu.memory_space<vmem>>, vector<1x128xf32>
    %4 = vector.broadcast %3 : vector<1x128xf32> to vector<32x128xf32>
    %5 = arith.addf %2, %4 : vector<32x128xf32>
    %6 = arith.truncf %5 : vector<32x128xf32> to vector<32x128xbf16>
    %c0_5 = arith.constant 0 : index
    %c0_6 = arith.constant 0 : index
    %7 = vector.load %arg5[%c0_5, %c0_6] : memref<128x256xbf16, #tpu.memory_space<vmem>>, vector<128x256xbf16>
    %cst_7 = arith.constant dense<0.000000e+00> : vector<32x256xf32>
    %8 = tpu.matmul %6, %7, %cst_7 {dimension_numbers = #tpu.dot_dimension_numbers<[1], [0], [0], [1], [0, 0, 1, 1], [], []>} : vector<32x128xbf16>, vector<128x256xbf16>, vector<32x256xf32> -> vector<32x256xf32>
    %c0_8 = arith.constant 0 : index
    %c0_9 = arith.constant 0 : index
    %9 = vector.load %arg6[%c0_8, %c0_9] : memref<1x256xf32, #tpu.memory_space<vmem>>, vector<1x256xf32>
    %10 = vector.broadcast %9 : vector<1x256xf32> to vector<32x256xf32>
    %11 = arith.addf %8, %10 : vector<32x256xf32>
    %12 = arith.mulf %11, %11 : vector<32x256xf32>
    %13 = arith.mulf %11, %12 : vector<32x256xf32>
    %cst_10 = arith.constant 4.471500e-02 : f32
    %14 = vector.broadcast %cst_10 : f32 to vector<32x256xf32>
    %15 = arith.mulf %14, %13 : vector<32x256xf32>
    %16 = arith.addf %11, %15 : vector<32x256xf32>
    %cst_11 = arith.constant 0.797884583 : f32
    %17 = vector.broadcast %cst_11 : f32 to vector<32x256xf32>
    %18 = arith.mulf %17, %16 : vector<32x256xf32>
    %19 = math.tanh %18 : vector<32x256xf32>
    %cst_12 = arith.constant 1.000000e+00 : f32
    %20 = vector.broadcast %cst_12 : f32 to vector<32x256xf32>
    %21 = arith.addf %20, %19 : vector<32x256xf32>
    %cst_13 = arith.constant 5.000000e-01 : f32
    %22 = vector.broadcast %cst_13 : f32 to vector<32x256xf32>
    %23 = arith.mulf %22, %21 : vector<32x256xf32>
    %24 = arith.mulf %11, %23 : vector<32x256xf32>
    %25 = arith.truncf %24 : vector<32x256xf32> to vector<32x256xbf16>
    %c0_14 = arith.constant 0 : index
    %c0_15 = arith.constant 0 : index
    %26 = vector.load %arg7[%c0_14, %c0_15] : memref<256x128xbf16, #tpu.memory_space<vmem>>, vector<256x128xbf16>
    %cst_16 = arith.constant dense<0.000000e+00> : vector<32x128xf32>
    %27 = tpu.matmul %25, %26, %cst_16 {dimension_numbers = #tpu.dot_dimension_numbers<[1], [0], [0], [1], [0, 0, 1, 1], [], []>} : vector<32x256xbf16>, vector<256x128xbf16>, vector<32x128xf32> -> vector<32x128xf32>
    %c0_17 = arith.constant 0 : index
    %c0_18 = arith.constant 0 : index
    %28 = vector.load %arg8[%c0_17, %c0_18] : memref<1x128xf32, #tpu.memory_space<vmem>>, vector<1x128xf32>
    %29 = vector.broadcast %28 : vector<1x128xf32> to vector<32x128xf32>
    %30 = arith.addf %27, %29 : vector<32x128xf32>
    %31 = arith.addf %30, %5 : vector<32x128xf32>
    %32 = arith.truncf %31 : vector<32x128xf32> to vector<32x128xbf16>
    %c0_19 = arith.constant 0 : index
    %c0_20 = arith.constant 0 : index
    %33 = vector.load %arg9[%c0_19, %c0_20] : memref<128x128xbf16, #tpu.memory_space<vmem>>, vector<128x128xbf16>
    %cst_21 = arith.constant dense<0.000000e+00> : vector<32x128xf32>
    %34 = tpu.matmul %32, %33, %cst_21 {dimension_numbers = #tpu.dot_dimension_numbers<[1], [0], [0], [1], [0, 0, 1, 1], [], []>} : vector<32x128xbf16>, vector<128x128xbf16>, vector<32x128xf32> -> vector<32x128xf32>
    %c0_22 = arith.constant 0 : index
    %c0_23 = arith.constant 0 : index
    %35 = vector.load %arg10[%c0_22, %c0_23] : memref<1x128xf32, #tpu.memory_space<vmem>>, vector<1x128xf32>
    %36 = vector.broadcast %35 : vector<1x128xf32> to vector<32x128xf32>
    %37 = arith.addf %34, %36 : vector<32x128xf32>
    %38 = tpu.iota {dimensions = array<i32: 1>} : vector<32x128xi32>
    %c3_i32 = arith.constant 3 : i32
    %39 = vector.broadcast %c3_i32 : i32 to vector<32x128xi32>
    %40 = arith.cmpi eq, %38, %39 : vector<32x128xi32>
    %41 = arith.negf %37 : vector<32x128xf32>
    %42 = math.exp %41 : vector<32x128xf32>
    %cst_24 = arith.constant 1.000000e+00 : f32
    %43 = vector.broadcast %cst_24 : f32 to vector<32x128xf32>
    %44 = arith.addf %43, %42 : vector<32x128xf32>
    %45 = arith.divf %43, %44 : vector<32x128xf32>
    %46 = arith.select %40, %45, %37 : vector<32x128xi1>, vector<32x128xf32>
    %c32_i32 = arith.constant 32 : i32
    %47 = arith.muli %arg0, %c32_i32 : i32
    %48 = tpu.iota {dimensions = array<i32: 0>} : vector<32x1xi32>
    %49 = vector.broadcast %47 : i32 to vector<32x1xi32>
    %50 = arith.addi %49, %48 : vector<32x1xi32>
    %c16_i32 = arith.constant 16 : i32
    %c0_i32 = arith.constant 0 : i32
    %51 = arith.cmpi eq, %c16_i32, %c0_i32 : i32
    %c1_i32 = arith.constant 1 : i32
    %52 = arith.select %51, %c1_i32, %c16_i32 : i32
    %53 = vector.broadcast %52 : i32 to vector<32x1xi32>
    %54 = arith.remsi %50, %53 : vector<32x1xi32>
    %c0_i32_25 = arith.constant 0 : i32
    %55 = vector.broadcast %c0_i32_25 : i32 to vector<32x1xi32>
    %56 = arith.cmpi ne, %54, %55 : vector<32x1xi32>
    %c0_i32_26 = arith.constant 0 : i32
    %57 = vector.broadcast %c0_i32_26 : i32 to vector<32x1xi32>
    %58 = arith.cmpi slt, %54, %57 : vector<32x1xi32>
    %c0_i32_27 = arith.constant 0 : i32
    %59 = arith.cmpi slt, %52, %c0_i32_27 : i32
    %60 = vector.broadcast %59 : i1 to vector<32x1xi1>
    %61 = vector.broadcast %60 : vector<32x1xi1> to vector<32x1xi1>
    %62 = arith.xori %58, %61 : vector<32x1xi1>
    %63 = arith.andi %62, %56 : vector<32x1xi1>
    %64 = vector.broadcast %52 : i32 to vector<32x1xi32>
    %65 = arith.addi %54, %64 : vector<32x1xi32>
    %66 = arith.select %63, %65, %54 : vector<32x1xi1>, vector<32x1xi32>
    %c0_28 = arith.constant 0 : index
    %67 = memref.load %arg1[%c0_28] : memref<1xi32, #tpu.memory_space<smem>>
    %68 = vector.broadcast %67 : i32 to vector<32x1xi32>
    %69 = arith.cmpi slt, %66, %68 : vector<32x1xi32>
    %cst_29 = arith.constant 0.000000e+00 : f32
    %70 = vector.shape_cast %69 : vector<32x1xi1> to vector<32x1xi1>
    %71 = vector.broadcast %70 : vector<32x1xi1> to vector<32x128xi1>
    %72 = vector.broadcast %cst_29 : f32 to vector<32x128xf32>
    %73 = arith.select %71, %46, %72 : vector<32x128xi1>, vector<32x128xf32>
    %c0_30 = arith.constant 0 : index
    %c0_31 = arith.constant 0 : index
    %74 = vector.load %arg11[%c0_30, %c0_31] : memref<32x128xf32, #tpu.memory_space<vmem>>, vector<32x128xf32>
    tpu.vector_store %arg11[%c0_30, %c0_31], %73 {strides = array<i32>} : memref<32x128xf32, #tpu.memory_space<vmem>>, vector<32x128xf32>,
    return
  }
  func.func @transform_0(%arg0: i32, %arg1: memref<1xi32, #tpu.memory_space<smem>>) -> (i32, i32) {
    %c0_i32 = arith.constant 0 : i32
    %c0_i32_0 = arith.constant 0 : i32
    return %arg0, %c0_i32 : i32, i32
  }
  func.func @transform_1(%arg0: i32, %arg1: memref<1xi32, #tpu.memory_space<smem>>) -> (i32, i32) {
    %c0_i32 = arith.constant 0 : i32
    %c0_i32_0 = arith.constant 0 : i32
    %c0_i32_1 = arith.constant 0 : i32
    return %c0_i32, %c0_i32_0 : i32, i32
  }
  func.func @transform_2(%arg0: i32, %arg1: memref<1xi32, #tpu.memory_space<smem>>) -> (i32, i32) {
    %c0_i32 = arith.constant 0 : i32
    %c0_i32_0 = arith.constant 0 : i32
    %c0_i32_1 = arith.constant 0 : i32
    return %c0_i32, %c0_i32_0 : i32, i32
  }
  func.func @transform_3(%arg0: i32, %arg1: memref<1xi32, #tpu.memory_space<smem>>) -> (i32, i32) {
    %c0_i32 = arith.constant 0 : i32
    %c0_i32_0 = arith.constant 0 : i32
    %c0_i32_1 = arith.constant 0 : i32
    return %c0_i32, %c0_i32_0 : i32, i32
  }
  func.func @transform_4(%arg0: i32, %arg1: memref<1xi32, #tpu.memory_space<smem>>) -> (i32, i32) {
    %c0_i32 = arith.constant 0 : i32
    %c0_i32_0 = arith.constant 0 : i32
    %c0_i32_1 = arith.constant 0 : i32
    return %c0_i32, %c0_i32_0 : i32, i32
  }
  func.func @transform_5(%arg0: i32, %arg1: memref<1xi32, #tpu.memory_space<smem>>) -> (i32, i32) {
    %c0_i32 = arith.constant 0 : i32
    %c0_i32_0 = arith.constant 0 : i32
    %c0_i32_1 = arith.constant 0 : i32
    return %c0_i32, %c0_i32_0 : i32, i32
  }
  func.func @transform_6(%arg0: i32, %arg1: memref<1xi32, #tpu.memory_space<smem>>) -> (i32, i32) {
    %c0_i32 = arith.constant 0 : i32
    %c0_i32_0 = arith.constant 0 : i32
    %c0_i32_1 = arith.constant 0 : i32
    return %c0_i32, %c0_i32_0 : i32, i32
  }
  func.func @transform_7(%arg0: i32, %arg1: memref<1xi32, #tpu.memory_space<smem>>) -> (i32, i32) {
    %c0_i32 = arith.constant 0 : i32
    %c0_i32_0 = arith.constant 0 : i32
    %c0_i32_1 = arith.constant 0 : i32
    return %c0_i32, %c0_i32_0 : i32, i32
  }
  func.func @transform_8(%arg0: i32, %arg1: memref<1xi32, #tpu.memory_space<smem>>) -> (i32, i32) {
    %c0_i32 = arith.constant 0 : i32
    %c0_i32_0 = arith.constant 0 : i32
    %c0_i32_1 = arith.constant 0 : i32
    return %c0_i32, %c0_i32_0 : i32, i32
  }
  func.func @transform_9(%arg0: i32, %arg1: memref<1xi32, #tpu.memory_space<smem>>) -> (i32, i32) {
    %c0_i32 = arith.constant 0 : i32
    %c0_i32_0 = arith.constant 0 : i32
    return %arg0, %c0_i32 : i32, i32
  }
}

</mosaic_0001>

<llo_original>
// kernel: moge_forward.1
$region0: #{moge_forward.1}
  #allocation0 [shape = 'u32[]', space=smem, size = 0x4, offset = 0x4, fixed_abs, tag = 'smem constant byte address 0x4 - core index']
  #allocation1 [shape = 'u32[144,128]{1,0:T(1,128)}', space=vmem, size = 0x12000, scoped, tag = 'internal scratch']
  #allocation2 [shape = 's32[1]{0}', space=sflag, size = 0x4, scoped, tag = 'scoped memory for moge_forward.1']
  #allocation3 [shape = 's32[1]{0:T(128)S(6)}', space=smem, size = 0x200, scoped, tag = 'prefetched SMEM operand 0']
  %s0 = inlined_call_operand.<no memory space> [shape: s32[1], index: 0, kind: input, shape index: {}]
  %s1 = inlined_call_operand.vmem [shape: bf16[32,128], index: 1, kind: input, shape index: {}]
  %s2 = inlined_call_operand.vmem [shape: bf16[128,128], index: 2, kind: input, shape index: {}]
  %s3 = inlined_call_operand.vmem [shape: f32[1,128], index: 3, kind: input, shape index: {}]
  %s4 = inlined_call_operand.vmem [shape: bf16[128,256], index: 4, kind: input, shape index: {}]
  %s5 = inlined_call_operand.vmem [shape: f32[1,256], index: 5, kind: input, shape index: {}]
  %s6 = inlined_call_operand.vmem [shape: bf16[256,128], index: 6, kind: input, shape index: {}]
  %s7 = inlined_call_operand.vmem [shape: f32[1,128], index: 7, kind: input, shape index: {}]
  %s8 = inlined_call_operand.vmem [shape: bf16[128,128], index: 8, kind: input, shape index: {}]
  %s9 = inlined_call_operand.vmem [shape: f32[1,128], index: 9, kind: input, shape index: {}]
  %s10 = inlined_call_operand.vmem [shape: f32[32,128], index: 10, kind: output, shape index: {}]
  %s11 = sld [smem:[#allocation0]]
  $region46: #{moge_forward.1} parent=0
    _
  %s13 = ssub.s32 1, %s11
  %s14 = scalar_select 0, %s13, %s11
  %15 = sst [smem:[#allocation3]] %s0
  // Predicated region
  $region2: #{moge_forward.1} parent=0 // pred_check
    _
  $region3: #{moge_forward.1} parent=0 // pred_check_branch
    %17 = sbr.rel (0) target = $region5
  $region4: #{moge_forward.1} parent=0 // pred_region
    _
  $region5: #{moge_forward.1} parent=0 // pred_fallthru
    _
  // Predicated region
  $region6: #{moge_forward.1} parent=0 // pred_check
    _
  $region7: #{moge_forward.1} parent=0 // pred_check_branch
    %19 = sbr.rel (0) target = $region9
  $region8: #{moge_forward.1} parent=0 // pred_region
    _
  $region9: #{moge_forward.1} parent=0 // pred_fallthru
    _
  // Predicated region
  $region10: #{moge_forward.1} parent=0 // pred_check
    _
  $region11: #{moge_forward.1} parent=0 // pred_check_branch
    %21 = sbr.rel (0) target = $region13
  $region12: #{moge_forward.1} parent=0 // pred_region
    _
  $region13: #{moge_forward.1} parent=0 // pred_fallthru
    _
  // Predicated region
  $region14: #{moge_forward.1} parent=0 // pred_check
    _
  $region15: #{moge_forward.1} parent=0 // pred_check_branch
    %23 = sbr.rel (0) target = $region17
  $region16: #{moge_forward.1} parent=0 // pred_region
    _
  $region17: #{moge_forward.1} parent=0 // pred_fallthru
    _
  // Predicated region
  $region18: #{moge_forward.1} parent=0 // pred_check
    _
  $region19: #{moge_forward.1} parent=0 // pred_check_branch
    %25 = sbr.rel (0) target = $region21
  $region20: #{moge_forward.1} parent=0 // pred_region
    _
  $region21: #{moge_forward.1} parent=0 // pred_fallthru
    _
  // Predicated region
  $region22: #{moge_forward.1} parent=0 // pred_check
    _
  $region23: #{moge_forward.1} parent=0 // pred_check_branch
    %27 = sbr.rel (0) target = $region25
  $region24: #{moge_forward.1} parent=0 // pred_region
    _
  $region25: #{moge_forward.1} parent=0 // pred_fallthru
    _
  // Predicated region
  $region26: #{moge_forward.1} parent=0 // pred_check
    _
  $region27: #{moge_forward.1} parent=0 // pred_check_branch
    %29 = sbr.rel (0) target = $region29
  $region28: #{moge_forward.1} parent=0 // pred_region
    _
  $region29: #{moge_forward.1} parent=0 // pred_fallthru
    _
  // Predicated region
  $region30: #{moge_forward.1} parent=0 // pred_check
    _
  $region31: #{moge_forward.1} parent=0 // pred_check_branch
    %31 = sbr.rel (0) target = $region33
  $region32: #{moge_forward.1} parent=0 // pred_region
    _
  $region33: #{moge_forward.1} parent=0 // pred_fallthru
    _
  // Predicated region
  $region34: #{moge_forward.1} parent=0 // pred_check
    _
  $region35: #{moge_forward.1} parent=0 // pred_check_branch
    %33 = sbr.rel (0) target = $region37
  $region36: #{moge_forward.1} parent=0 // pred_region
    _
  $region37: #{moge_forward.1} parent=0 // pred_fallthru
    _
  %v35 = vld [vmem:[%s1] sm:$0xf]
  %v36 = vld [vmem:[%s1 + $0x4] sm:$0xf]
  %v37 = vld [vmem:[%s1 + $0x8] sm:$0xf]
  %v38 = vld [vmem:[%s1 + $0xc] sm:$0xf]
  %v39 = vld [vmem:[%s2] sm:$0xf]
  %v40 = vld [vmem:[%s2 + $0x4] sm:$0xf]
  %v41 = vld [vmem:[%s2 + $0x8] sm:$0xf]
  %v42 = vld [vmem:[%s2 + $0xc] sm:$0xf]
  %v43 = vld [vmem:[%s2 + $0x10] sm:$0xf]
  %v44 = vld [vmem:[%s2 + $0x14] sm:$0xf]
  %v45 = vld [vmem:[%s2 + $0x18] sm:$0xf]
  %v46 = vld [vmem:[%s2 + $0x1c] sm:$0xf]
  %v47 = vld [vmem:[%s2 + $0x20] sm:$0xf]
  %v48 = vld [vmem:[%s2 + $0x24] sm:$0xf]
  %v49 = vld [vmem:[%s2 + $0x28] sm:$0xf]
  %v50 = vld [vmem:[%s2 + $0x2c] sm:$0xf]
  %v51 = vld [vmem:[%s2 + $0x30] sm:$0xf]
  %v52 = vld [vmem:[%s2 + $0x34] sm:$0xf]
  %v53 = vld [vmem:[%s2 + $0x38] sm:$0xf]
  %v54 = vld [vmem:[%s2 + $0x3c] sm:$0xf]
  %v55 = vld [vmem:[%s3] sm:$0x1]
  %v57 = vlaneseq
  %v58 = vshrl.u32 %v57, 7
  %v59 = vsub.s32 0, %v58
  %v60 = vrot.slane %v55, %v59
  %v66 = vunpack.c.l.b16 %v35
  %v67 = vunpack.c.l.b16 %v36
  %v68 = vunpack.c.l.b16 %v37
  %v69 = vunpack.c.l.b16 %v38
  %v70 = vpack.c.b16 %v67, %v66
  %v71 = vpack.c.b16 %v69, %v68
  %v90 = vunpack.c.l.b16 %v39
  %v91 = vunpack.c.l.b16 %v40
  %v92 = vunpack.c.l.b16 %v41
  %v93 = vunpack.c.l.b16 %v42
  %v94 = vunpack.c.l.b16 %v43
  %v95 = vunpack.c.l.b16 %v44
  %v96 = vunpack.c.l.b16 %v45
  %v97 = vunpack.c.l.b16 %v46
  %v98 = vunpack.c.l.b16 %v47
  %v99 = vunpack.c.l.b16 %v48
  %v100 = vunpack.c.l.b16 %v49
  %v101 = vunpack.c.l.b16 %v50
  %v102 = vunpack.c.l.b16 %v51
  %v103 = vunpack.c.l.b16 %v52
  %v104 = vunpack.c.l.b16 %v53
  %v105 = vunpack.c.l.b16 %v54
  %v106 = vpack.c.b16 %v91, %v90
  %v107 = vpack.c.b16 %v93, %v92
  %v108 = vpack.c.b16 %v95, %v94
  %v109 = vpack.c.b16 %v97, %v96
  %v110 = vpack.c.b16 %v99, %v98
  %v111 = vpack.c.b16 %v101, %v100
  %v112 = vpack.c.b16 %v103, %v102
  %v113 = vpack.c.b16 %v105, %v104
  %122 = vmatprep.subr.bf16.mxu0 0
  %123 = vmatpush1.bf16.msra.mxu0 %v113
  %124 = vmatprep.subr.bf16.mxu0 0
  %125 = vmatpush1.bf16.msra.mxu0 %v112
  %126 = vmatprep.subr.bf16.mxu0 0
  %127 = vmatpush1.bf16.msra.mxu0 %v111
  %128 = vmatprep.subr.bf16.mxu0 0
  %129 = vmatpush1.bf16.msra.mxu0 %v110
  %130 = vmatprep.subr.bf16.mxu0 0
  %131 = vmatpush1.bf16.msra.mxu0 %v109
  %132 = vmatprep.subr.bf16.mxu0 0
  %133 = vmatpush1.bf16.msra.mxu0 %v108
  %134 = vmatprep.subr.bf16.mxu0 0
  %135 = vmatpush1.bf16.msra.mxu0 %v107
  %136 = vmatprep.subr.bf16.mxu0 0
  %137 = vmatpush1.bf16.msra.mxu0 %v106
  %138 = vmatprep.subr.bf16.mxu0 0
  %139 = vmatpush2.bf16.msra.mxu0 0
  %140 = vmatprep.subr.bf16.mxu0 0
  %141 = vmatpush2.bf16.msra.mxu0 0
  %142 = vmatprep.subr.bf16.mxu0 0
  %143 = vmatpush2.bf16.msra.mxu0 0
  %144 = vmatprep.subr.bf16.mxu0 0
  %145 = vmatpush2.bf16.msra.mxu0 0
  %146 = vmatprep.subr.bf16.mxu0 0
  %147 = vmatpush2.bf16.msra.mxu0 0
  %148 = vmatprep.subr.bf16.mxu0 0
  %149 = vmatpush2.bf16.msra.mxu0 0
  %150 = vmatprep.subr.bf16.mxu0 0
  %151 = vmatpush2.bf16.msra.mxu0 0
  %152 = vmatprep.subr.bf16.mxu0 0
  %153 = vmatpush2.bf16.msra.mxu0 0
  %154 = vmatprep.mubr.bf16.mxu0 0
  %155 = vmatmul.mubr.bf16.gmra.mxu0 %v70
  %v156 = vpop.f32.mrf.mxu0
  %v157 = vadd.f32 %v60, %v156
  %v158 = vpop.f32.mrf.mxu0
  %v159 = vpop.f32.mrf.mxu0
  %v160 = vadd.f32 %v60, %v159
  %v161 = vpop.f32.mrf.mxu0
  %162 = vmatprep.mubr.bf16.mxu0 0
  %163 = vmatmul.mubr.bf16.gmra.mxu0 %v71
  %v164 = vpop.f32.mrf.mxu0
  %v165 = vadd.f32 %v60, %v164
  %v166 = vpop.f32.mrf.mxu0
  %v167 = vpop.f32.mrf.mxu0
  %v168 = vadd.f32 %v60, %v167
  %v169 = vpop.f32.mrf.mxu0
  %170 = vdwg.mxu0
  %v171 = vpack.c.bf16 %v160, %v157
  %v172 = vpack.c.bf16 %v168, %v165
  %v173 = vld [vmem:[%s4] sm:$0xff]
  %v174 = vld [vmem:[%s4 + $0x8] sm:$0xff]
  %v175 = vld [vmem:[%s4 + $0x10] sm:$0xff]
  %v176 = vld [vmem:[%s4 + $0x18] sm:$0xff]
  %v177 = vld [vmem:[%s4 + $0x20] sm:$0xff]
  %v178 = vld [vmem:[%s4 + $0x28] sm:$0xff]
  %v179 = vld [vmem:[%s4 + $0x30] sm:$0xff]
  %v180 = vld [vmem:[%s4 + $0x38] sm:$0xff]
  %v181 = vld [vmem:[%s4 + $0x40] sm:$0xff]
  %v182 = vld [vmem:[%s4 + $0x48] sm:$0xff]
  %v183 = vld [vmem:[%s4 + $0x50] sm:$0xff]
  %v184 = vld [vmem:[%s4 + $0x58] sm:$0xff]
  %v185 = vld [vmem:[%s4 + $0x60] sm:$0xff]
  %v186 = vld [vmem:[%s4 + $0x68] sm:$0xff]
  %v187 = vld [vmem:[%s4 + $0x70] sm:$0xff]
  %v188 = vld [vmem:[%s4 + $0x78] sm:$0xff]
  %v189 = vld [vmem:[%s5] sm:$0x3]
  %v191 = vlaneseq
  %v192 = vshrl.u32 %v191, 7
  %v193 = vsub.s32 0, %v192
  %v194 = vrot.slane %v189, %v193
  %v195 = vlaneseq
  %v196 = vshrl.u32 %v195, 7
  %v197 = vsub.s32 1, %v196
  %v198 = vrot.slane %v189, %v197
  %v217 = vunpack.c.l.b16 %v173
  %v218 = vunpack.c.h.b16 %v173
  %v219 = vunpack.c.l.b16 %v174
  %v220 = vunpack.c.h.b16 %v174
  %v221 = vunpack.c.l.b16 %v175
  %v222 = vunpack.c.h.b16 %v175
  %v223 = vunpack.c.l.b16 %v176
  %v224 = vunpack.c.h.b16 %v176
  %v225 = vunpack.c.l.b16 %v177
  %v226 = vunpack.c.h.b16 %v177
  %v227 = vunpack.c.l.b16 %v178
  %v228 = vunpack.c.h.b16 %v178
  %v229 = vunpack.c.l.b16 %v179
  %v230 = vunpack.c.h.b16 %v179
  %v231 = vunpack.c.l.b16 %v180
  %v232 = vunpack.c.h.b16 %v180
  %v233 = vunpack.c.l.b16 %v181
  %v234 = vunpack.c.h.b16 %v181
  %v235 = vunpack.c.l.b16 %v182
  %v236 = vunpack.c.h.b16 %v182
  %v237 = vunpack.c.l.b16 %v183
  %v238 = vunpack.c.h.b16 %v183
  %v239 = vunpack.c.l.b16 %v184
  %v240 = vunpack.c.h.b16 %v184
  %v241 = vunpack.c.l.b16 %v185
  %v242 = vunpack.c.h.b16 %v185
  %v243 = vunpack.c.l.b16 %v186
  %v244 = vunpack.c.h.b16 %v186
  %v245 = vunpack.c.l.b16 %v187
  %v246 = vunpack.c.h.b16 %v187
  %v247 = vunpack.c.l.b16 %v188
  %v248 = vunpack.c.h.b16 %v188
  %v249 = vpack.c.b16 %v219, %v217
  %v250 = vpack.c.b16 %v220, %v218
  %v251 = vpack.c.b16 %v223, %v221
  %v252 = vpack.c.b16 %v224, %v222
  %v253 = vpack.c.b16 %v227, %v225
  %v254 = vpack.c.b16 %v228, %v226
  %v255 = vpack.c.b16 %v231, %v229
  %v256 = vpack.c.b16 %v232, %v230
  %v257 = vpack.c.b16 %v235, %v233
  %v258 = vpack.c.b16 %v236, %v234
  %v259 = vpack.c.b16 %v239, %v237
  %v260 = vpack.c.b16 %v240, %v238
  %v261 = vpack.c.b16 %v243, %v241
  %v262 = vpack.c.b16 %v244, %v242
  %v263 = vpack.c.b16 %v247, %v245
  %v264 = vpack.c.b16 %v248, %v246
  %281 = vmatprep.subr.bf16.mxu0 %v264
  %282 = vmatpush1.bf16.msra.mxu0 %v263
  %283 = vmatprep.subr.bf16.mxu0 %v262
  %284 = vmatpush1.bf16.msra.mxu0 %v261
  %285 = vmatprep.subr.bf16.mxu0 %v260
  %286 = vmatpush1.bf16.msra.mxu0 %v259
  %287 = vmatprep.subr.bf16.mxu0 %v258
  %288 = vmatpush1.bf16.msra.mxu0 %v257
  %289 = vmatprep.subr.bf16.mxu0 %v256
  %290 = vmatpush1.bf16.msra.mxu0 %v255
  %291 = vmatprep.subr.bf16.mxu0 %v254
  %292 = vmatpush1.bf16.msra.mxu0 %v253
  %293 = vmatprep.subr.bf16.mxu0 %v252
  %294 = vmatpush1.bf16.msra.mxu0 %v251
  %295 = vmatprep.subr.bf16.mxu0 %v250
  %296 = vmatpush1.bf16.msra.mxu0 %v249
  %297 = vmatprep.subr.bf16.mxu0 0
  %298 = vmatpush2.bf16.msra.mxu0 0
  %299 = vmatprep.subr.bf16.mxu0 0
  %300 = vmatpush2.bf16.msra.mxu0 0
  %301 = vmatprep.subr.bf16.mxu0 0
  %302 = vmatpush2.bf16.msra.mxu0 0
  %303 = vmatprep.subr.bf16.mxu0 0
  %304 = vmatpush2.bf16.msra.mxu0 0
  %305 = vmatprep.subr.bf16.mxu0 0
  %306 = vmatpush2.bf16.msra.mxu0 0
  %307 = vmatprep.subr.bf16.mxu0 0
  %308 = vmatpush2.bf16.msra.mxu0 0
  %309 = vmatprep.subr.bf16.mxu0 0
  %310 = vmatpush2.bf16.msra.mxu0 0
  %311 = vmatprep.subr.bf16.mxu0 0
  %312 = vmatpush2.bf16.msra.mxu0 0
  %313 = vmatprep.mubr.bf16.mxu0 0
  %314 = vmatmul.mubr.bf16.gmra.mxu0 %v171
  %v315 = vpop.f32.mrf.mxu0
  %v316 = vadd.f32 %v194, %v315
  %v317 = vpop.f32.mrf.mxu0
  %v318 = vadd.f32 %v198, %v317
  %v319 = vpop.f32.mrf.mxu0
  %v320 = vadd.f32 %v194, %v319
  %v321 = vpop.f32.mrf.mxu0
  %v322 = vadd.f32 %v198, %v321
  %323 = vmatprep.mubr.bf16.mxu0 0
  %324 = vmatmul.mubr.bf16.gmra.mxu0 %v172
  %v325 = vpop.f32.mrf.mxu0
  %v326 = vadd.f32 %v194, %v325
  %v327 = vpop.f32.mrf.mxu0
  %v328 = vadd.f32 %v198, %v327
  %v329 = vpop.f32.mrf.mxu0
  %v330 = vadd.f32 %v194, %v329
  %v331 = vpop.f32.mrf.mxu0
  %v332 = vadd.f32 %v198, %v331
  %333 = vdwg.mxu0
  %v334 = vmul.f32 %v316, %v316
  %v335 = vmul.f32 %v318, %v318
  %v336 = vmul.f32 %v320, %v320
  %v337 = vmul.f32 %v322, %v322
  %v338 = vmul.f32 %v326, %v326
  %v339 = vmul.f32 %v328, %v328
  %v340 = vmul.f32 %v330, %v330
  %v341 = vmul.f32 %v332, %v332
  %v342 = vmul.f32 %v316, %v334
  %v343 = vmul.f32 %v318, %v335
  %v344 = vmul.f32 %v320, %v336
  %v345 = vmul.f32 %v322, %v337
  %v346 = vmul.f32 %v326, %v338
  %v347 = vmul.f32 %v328, %v339
  %v348 = vmul.f32 %v330, %v340
  %v349 = vmul.f32 %v332, %v341
  %v350 = vmul.f32 %v342, 0.044715
  %v351 = vmul.f32 %v343, 0.044715
  %v352 = vmul.f32 %v344, 0.044715
  %v353 = vmul.f32 %v345, 0.044715
  %v354 = vmul.f32 %v346, 0.044715
  %v355 = vmul.f32 %v347, 0.044715
  %v356 = vmul.f32 %v348, 0.044715
  %v357 = vmul.f32 %v349, 0.044715
  %v358 = vadd.f32 %v316, %v350
  %v359 = vadd.f32 %v318, %v351
  %v360 = vadd.f32 %v320, %v352
  %v361 = vadd.f32 %v322, %v353
  %v362 = vadd.f32 %v326, %v354
  %v363 = vadd.f32 %v328, %v355
  %v364 = vadd.f32 %v330, %v356
  %v365 = vadd.f32 %v332, %v357
  %v366 = vmul.f32 %v358, 0.7978846
  %v367 = vmul.f32 %v359, 0.7978846
  %v368 = vmul.f32 %v360, 0.7978846
  %v369 = vmul.f32 %v361, 0.7978846
  %v370 = vmul.f32 %v362, 0.7978846
  %v371 = vmul.f32 %v363, 0.7978846
  %v372 = vmul.f32 %v364, 0.7978846
  %v373 = vmul.f32 %v365, 0.7978846
  %v374 = vtanh.pop %v366
  %v375 = vtanh.pop %v367
  %v376 = vtanh.pop %v368
  %v377 = vtanh.pop %v369
  %v378 = vtanh.pop %v370
  %v379 = vtanh.pop %v371
  %v380 = vtanh.pop %v372
  %v381 = vtanh.pop %v373
  %v382 = vadd.f32 %v374, 1.0
  %v383 = vadd.f32 %v375, 1.0
  %v384 = vadd.f32 %v376, 1.0
  %v385 = vadd.f32 %v377, 1.0
  %v386 = vadd.f32 %v378, 1.0
  %v387 = vadd.f32 %v379, 1.0
  %v388 = vadd.f32 %v380, 1.0
  %v389 = vadd.f32 %v381, 1.0
  %v390 = vmul.f32 %v382, 0.5
  %v391 = vmul.f32 %v383, 0.5
  %v392 = vmul.f32 %v384, 0.5
  %v393 = vmul.f32 %v385, 0.5
  %v394 = vmul.f32 %v386, 0.5
  %v395 = vmul.f32 %v387, 0.5
  %v396 = vmul.f32 %v388, 0.5
  %v397 = vmul.f32 %v389, 0.5
  %v398 = vmul.f32 %v316, %v390
  %v399 = vmul.f32 %v318, %v391
  %v400 = vmul.f32 %v320, %v392
  %v401 = vmul.f32 %v322, %v393
  %v402 = vmul.f32 %v326, %v394
  %v403 = vmul.f32 %v328, %v395
  %v404 = vmul.f32 %v330, %v396
  %v405 = vmul.f32 %v332, %v397
  %v406 = vpack.c.bf16 %v400, %v398
  %v407 = vpack.c.bf16 %v401, %v399
  %v408 = vpack.c.bf16 %v404, %v402
  %v409 = vpack.c.bf16 %v405, %v403
  %v410 = vld [vmem:[%s6] sm:$0xf]
  %v411 = vld [vmem:[%s6 + $0x4] sm:$0xf]
  %v412 = vld [vmem:[%s6 + $0x8] sm:$0xf]
  %v413 = vld [vmem:[%s6 + $0xc] sm:$0xf]
  %v414 = vld [vmem:[%s6 + $0x10] sm:$0xf]
  %v415 = vld [vmem:[%s6 + $0x14] sm:$0xf]
  %v416 = vld [vmem:[%s6 + $0x18] sm:$0xf]
  %v417 = vld [vmem:[%s6 + $0x1c] sm:$0xf]
  %v418 = vld [vmem:[%s6 + $0x20] sm:$0xf]
  %v419 = vld [vmem:[%s6 + $0x24] sm:$0xf]
  %v420 = vld [vmem:[%s6 + $0x28] sm:$0xf]
  %v421 = vld [vmem:[%s6 + $0x2c] sm:$0xf]
  %v422 = vld [vmem:[%s6 + $0x30] sm:$0xf]
  %v423 = vld [vmem:[%s6 + $0x34] sm:$0xf]
  %v424 = vld [vmem:[%s6 + $0x38] sm:$0xf]
  %v425 = vld [vmem:[%s6 + $0x3c] sm:$0xf]
  %v426 = vld [vmem:[%s6 + $0x40] sm:$0xf]
  %v427 = vld [vmem:[%s6 + $0x44] sm:$0xf]
  %v428 = vld [vmem:[%s6 + $0x48] sm:$0xf]
  %v429 = vld [vmem:[%s6 + $0x4c] sm:$0xf]
  %v430 = vld [vmem:[%s6 + $0x50] sm:$0xf]
  %v431 = vld [vmem:[%s6 + $0x54] sm:$0xf]
  %v432 = vld [vmem:[%s6 + $0x58] sm:$0xf]
  %v433 = vld [vmem:[%s6 + $0x5c] sm:$0xf]
  %v434 = vld [vmem:[%s6 + $0x60] sm:$0xf]
  %v435 = vld [vmem:[%s6 + $0x64] sm:$0xf]
  %v436 = vld [vmem:[%s6 + $0x68] sm:$0xf]
  %v437 = vld [vmem:[%s6 + $0x6c] sm:$0xf]
  %v438 = vld [vmem:[%s6 + $0x70] sm:$0xf]
  %v439 = vld [vmem:[%s6 + $0x74] sm:$0xf]
  %v440 = vld [vmem:[%s6 + $0x78] sm:$0xf]
  %v441 = vld [vmem:[%s6 + $0x7c] sm:$0xf]
  %v442 = vld [vmem:[%s7] sm:$0x1]
  %v444 = vlaneseq
  %v445 = vshrl.u32 %v444, 7
  %v446 = vsub.s32 0, %v445
  %v447 = vrot.slane %v442, %v446
  %v481 = vunpack.c.l.b16 %v410
  %v482 = vunpack.c.l.b16 %v411
  %v483 = vunpack.c.l.b16 %v412
  %v484 = vunpack.c.l.b16 %v413
  %v485 = vunpack.c.l.b16 %v414
  %v486 = vunpack.c.l.b16 %v415
  %v487 = vunpack.c.l.b16 %v416
  %v488 = vunpack.c.l.b16 %v417
  %v489 = vunpack.c.l.b16 %v418
  %v490 = vunpack.c.l.b16 %v419
  %v491 = vunpack.c.l.b16 %v420
  %v492 = vunpack.c.l.b16 %v421
  %v493 = vunpack.c.l.b16 %v422
  %v494 = vunpack.c.l.b16 %v423
  %v495 = vunpack.c.l.b16 %v424
  %v496 = vunpack.c.l.b16 %v425
  %v497 = vunpack.c.l.b16 %v426
  %v498 = vunpack.c.l.b16 %v427
  %v499 = vunpack.c.l.b16 %v428
  %v500 = vunpack.c.l.b16 %v429
  %v501 = vunpack.c.l.b16 %v430
  %v502 = vunpack.c.l.b16 %v431
  %v503 = vunpack.c.l.b16 %v432
  %v504 = vunpack.c.l.b16 %v433
  %v505 = vunpack.c.l.b16 %v434
  %v506 = vunpack.c.l.b16 %v435
  %v507 = vunpack.c.l.b16 %v436
  %v508 = vunpack.c.l.b16 %v437
  %v509 = vunpack.c.l.b16 %v438
  %v510 = vunpack.c.l.b16 %v439
  %v511 = vunpack.c.l.b16 %v440
  %v512 = vunpack.c.l.b16 %v441
  %v513 = vpack.c.b16 %v482, %v481
  %v514 = vpack.c.b16 %v484, %v483
  %v515 = vpack.c.b16 %v486, %v485
  %v516 = vpack.c.b16 %v488, %v487
  %v517 = vpack.c.b16 %v490, %v489
  %v518 = vpack.c.b16 %v492, %v491
  %v519 = vpack.c.b16 %v494, %v493
  %v520 = vpack.c.b16 %v496, %v495
  %v521 = vpack.c.b16 %v498, %v497
  %v522 = vpack.c.b16 %v500, %v499
  %v523 = vpack.c.b16 %v502, %v501
  %v524 = vpack.c.b16 %v504, %v503
  %v525 = vpack.c.b16 %v506, %v505
  %v526 = vpack.c.b16 %v508, %v507
  %v527 = vpack.c.b16 %v510, %v509
  %v528 = vpack.c.b16 %v512, %v511
  %545 = vmatprep.subr.bf16.mxu0 0
  %546 = vmatpush1.bf16.msra.mxu0 %v520
  %547 = vmatprep.subr.bf16.mxu0 0
  %548 = vmatpush1.bf16.msra.mxu0 %v519
  %549 = vmatprep.subr.bf16.mxu0 0
  %550 = vmatpush1.bf16.msra.mxu0 %v518
  %551 = vmatprep.subr.bf16.mxu0 0
  %552 = vmatpush1.bf16.msra.mxu0 %v517
  %553 = vmatprep.subr.bf16.mxu0 0
  %554 = vmatpush1.bf16.msra.mxu0 %v516
  %555 = vmatprep.subr.bf16.mxu0 0
  %556 = vmatpush1.bf16.msra.mxu0 %v515
  %557 = vmatprep.subr.bf16.mxu0 0
  %558 = vmatpush1.bf16.msra.mxu0 %v514
  %559 = vmatprep.subr.bf16.mxu0 0
  %560 = vmatpush1.bf16.msra.mxu0 %v513
  %561 = vmatprep.subr.bf16.mxu0 0
  %562 = vmatpush2.bf16.msra.mxu0 %v528
  %563 = vmatprep.subr.bf16.mxu0 0
  %564 = vmatpush2.bf16.msra.mxu0 %v527
  %565 = vmatprep.subr.bf16.mxu0 0
  %566 = vmatpush2.bf16.msra.mxu0 %v526
  %567 = vmatprep.subr.bf16.mxu0 0
  %568 = vmatpush2.bf16.msra.mxu0 %v525
  %569 = vmatprep.subr.bf16.mxu0 0
  %570 = vmatpush2.bf16.msra.mxu0 %v524
  %571 = vmatprep.subr.bf16.mxu0 0
  %572 = vmatpush2.bf16.msra.mxu0 %v523
  %573 = vmatprep.subr.bf16.mxu0 0
  %574 = vmatpush2.bf16.msra.mxu0 %v522
  %575 = vmatprep.subr.bf16.mxu0 0
  %576 = vmatpush2.bf16.msra.mxu0 %v521
  %577 = vmatprep.mubr.bf16.mxu0 %v407
  %578 = vmatmul.mubr.bf16.gmra.mxu0 %v406
  %v579 = vpop.f32.mrf.mxu0
  %v580 = vadd.f32 %v447, %v579
  %v581 = vpop.f32.mrf.mxu0
  %v582 = vpop.f32.mrf.mxu0
  %v583 = vadd.f32 %v447, %v582
  %v584 = vpop.f32.mrf.mxu0
  %585 = vmatprep.mubr.bf16.mxu0 %v409
  %586 = vmatmul.mubr.bf16.gmra.mxu0 %v408
  %v587 = vpop.f32.mrf.mxu0
  %v588 = vadd.f32 %v447, %v587
  %v589 = vpop.f32.mrf.mxu0
  %v590 = vpop.f32.mrf.mxu0
  %v591 = vadd.f32 %v447, %v590
  %v592 = vpop.f32.mrf.mxu0
  %593 = vdwg.mxu0
  %v594 = vadd.f32 %v580, %v157
  %v595 = vadd.f32 %v583, %v160
  %v596 = vadd.f32 %v588, %v165
  %v597 = vadd.f32 %v591, %v168
  %v598 = vpack.c.bf16 %v595, %v594
  %v599 = vpack.c.bf16 %v597, %v596
  %v600 = vld [vmem:[%s8] sm:$0xf]
  %v601 = vld [vmem:[%s8 + $0x4] sm:$0xf]
  %v602 = vld [vmem:[%s8 + $0x8] sm:$0xf]
  %v603 = vld [vmem:[%s8 + $0xc] sm:$0xf]
  %v604 = vld [vmem:[%s8 + $0x10] sm:$0xf]
  %v605 = vld [vmem:[%s8 + $0x14] sm:$0xf]
  %v606 = vld [vmem:[%s8 + $0x18] sm:$0xf]
  %v607 = vld [vmem:[%s8 + $0x1c] sm:$0xf]
  %v608 = vld [vmem:[%s8 + $0x20] sm:$0xf]
  %v609 = vld [vmem:[%s8 + $0x24] sm:$0xf]
  %v610 = vld [vmem:[%s8 + $0x28] sm:$0xf]
  %v611 = vld [vmem:[%s8 + $0x2c] sm:$0xf]
  %v612 = vld [vmem:[%s8 + $0x30] sm:$0xf]
  %v613 = vld [vmem:[%s8 + $0x34] sm:$0xf]
  %v614 = vld [vmem:[%s8 + $0x38] sm:$0xf]
  %v615 = vld [vmem:[%s8 + $0x3c] sm:$0xf]
  %v616 = vld [vmem:[%s9] sm:$0x1]
  %v618 = vlaneseq
  %v619 = vshrl.u32 %v618, 7
  %v620 = vsub.s32 0, %v619
  %v621 = vrot.slane %v616, %v620
  %v639 = vunpack.c.l.b16 %v600
  %v640 = vunpack.c.l.b16 %v601
  %v641 = vunpack.c.l.b16 %v602
  %v642 = vunpack.c.l.b16 %v603
  %v643 = vunpack.c.l.b16 %v604
  %v644 = vunpack.c.l.b16 %v605
  %v645 = vunpack.c.l.b16 %v606
  %v646 = vunpack.c.l.b16 %v607
  %v647 = vunpack.c.l.b16 %v608
  %v648 = vunpack.c.l.b16 %v609
  %v649 = vunpack.c.l.b16 %v610
  %v650 = vunpack.c.l.b16 %v611
  %v651 = vunpack.c.l.b16 %v612
  %v652 = vunpack.c.l.b16 %v613
  %v653 = vunpack.c.l.b16 %v614
  %v654 = vunpack.c.l.b16 %v615
  %v655 = vpack.c.b16 %v640, %v639
  %v656 = vpack.c.b16 %v642, %v641
  %v657 = vpack.c.b16 %v644, %v643
  %v658 = vpack.c.b16 %v646, %v645
  %v659 = vpack.c.b16 %v648, %v647
  %v660 = vpack.c.b16 %v650, %v649
  %v661 = vpack.c.b16 %v652, %v651
  %v662 = vpack.c.b16 %v654, %v653
  %671 = vmatprep.subr.bf16.mxu0 0
  %672 = vmatpush1.bf16.msra.mxu0 %v662
  %673 = vmatprep.subr.bf16.mxu0 0
  %674 = vmatpush1.bf16.msra.mxu0 %v661
  %675 = vmatprep.subr.bf16.mxu0 0
  %676 = vmatpush1.bf16.msra.mxu0 %v660
  %677 = vmatprep.subr.bf16.mxu0 0
  %678 = vmatpush1.bf16.msra.mxu0 %v659
  %679 = vmatprep.subr.bf16.mxu0 0
  %680 = vmatpush1.bf16.msra.mxu0 %v658
  %681 = vmatprep.subr.bf16.mxu0 0
  %682 = vmatpush1.bf16.msra.mxu0 %v657
  %683 = vmatprep.subr.bf16.mxu0 0
  %684 = vmatpush1.bf16.msra.mxu0 %v656
  %685 = vmatprep.subr.bf16.mxu0 0
  %686 = vmatpush1.bf16.msra.mxu0 %v655
  %687 = vmatprep.subr.bf16.mxu0 0
  %688 = vmatpush2.bf16.msra.mxu0 0
  %689 = vmatprep.subr.bf16.mxu0 0
  %690 = vmatpush2.bf16.msra.mxu0 0
  %691 = vmatprep.subr.bf16.mxu0 0
  %692 = vmatpush2.bf16.msra.mxu0 0
  %693 = vmatprep.subr.bf16.mxu0 0
  %694 = vmatpush2.bf16.msra.mxu0 0
  %695 = vmatprep.subr.bf16.mxu0 0
  %696 = vmatpush2.bf16.msra.mxu0 0
  %697 = vmatprep.subr.bf16.mxu0 0
  %698 = vmatpush2.bf16.msra.mxu0 0
  %699 = vmatprep.subr.bf16.mxu0 0
  %700 = vmatpush2.bf16.msra.mxu0 0
  %701 = vmatprep.subr.bf16.mxu0 0
  %702 = vmatpush2.bf16.msra.mxu0 0
  %703 = vmatprep.mubr.bf16.mxu0 0
  %704 = vmatmul.mubr.bf16.gmra.mxu0 %v598
  %v705 = vpop.f32.mrf.mxu0
  %v706 = vadd.f32 %v621, %v705
  %v707 = vpop.f32.mrf.mxu0
  %v708 = vpop.f32.mrf.mxu0
  %v709 = vadd.f32 %v621, %v708
  %v710 = vpop.f32.mrf.mxu0
  %711 = vmatprep.mubr.bf16.mxu0 0
  %712 = vmatmul.mubr.bf16.gmra.mxu0 %v599
  %v713 = vpop.f32.mrf.mxu0
  %v714 = vadd.f32 %v621, %v713
  %v715 = vpop.f32.mrf.mxu0
  %v716 = vpop.f32.mrf.mxu0
  %v717 = vadd.f32 %v621, %v716
  %v718 = vpop.f32.mrf.mxu0
  %719 = vdwg.mxu0
  %v720 = vlaneseq
  %v721 = vand.u32 %v720, 127
  %vm722 = vcmp.eq.s32.totalorder %v721, 3
  %v723 = vxor.u32 %v706, 2147483648
  %v724 = vxor.u32 %v709, 2147483648
  %v725 = vxor.u32 %v714, 2147483648
  %v726 = vxor.u32 %v717, 2147483648
  %v727 = vmul.f32 %v723, 1.442695
  %v728 = vpow.pop %v727
  %v729 = vmul.f32 %v724, 1.442695
  %v730 = vpow.pop %v729
  %v731 = vmul.f32 %v725, 1.442695
  %v732 = vpow.pop %v731
  %v733 = vmul.f32 %v726, 1.442695
  %v734 = vpow.pop %v733
  %v735 = vadd.f32 %v728, 1.0
  %v736 = vadd.f32 %v730, 1.0
  %v737 = vadd.f32 %v732, 1.0
  %v738 = vadd.f32 %v734, 1.0
  %v739 = vrcp.pop %v735
  %v740 = vmul.f32 1.0, %v739
  %v741 = vrcp.pop %v736
  %v742 = vmul.f32 1.0, %v741
  %v743 = vrcp.pop %v737
  %v744 = vmul.f32 1.0, %v743
  %v745 = vrcp.pop %v738
  %v746 = vmul.f32 1.0, %v745
  %v747 = vsel %vm722, %v740, %v706
  %v748 = vsel %vm722, %v742, %v709
  %v749 = vsel %vm722, %v744, %v714
  %v750 = vsel %vm722, %v746, %v717
  %s751 = smul.u32 0, 32
  %v752 = vlaneseq
  %v753 = vshrl.u32 %v752, 7
  %v754 = vadd.s32 %v753, 8
  %v755 = vadd.s32 %v753, 16
  %v756 = vadd.s32 %v753, 24
  %v757 = vstv %s751
  %v758 = vadd.s32 %v757, %v753
  %v759 = vadd.s32 %v757, %v754
  %v760 = vadd.s32 %v757, %v755
  %v761 = vadd.s32 %v757, %v756
  %vm762 = vcmp.lt.s32.totalorder %v758, 0
  %v763 = vsub.s32 0, %v758
  %v764 = vsel %vm762, %v763, %v758
  %v765 = vshrl.u32 %v764, 4
  %v766 = vand.u32 %v764, 15
  %v767 = vsub.s32 0, %v766
  %v768 = vsel %vm762, %v767, %v766
  %vm769 = vcmp.lt.s32.totalorder %v759, 0
  %v770 = vsub.s32 0, %v759
  %v771 = vsel %vm769, %v770, %v759
  %v772 = vshrl.u32 %v771, 4
  %v773 = vand.u32 %v771, 15
  %v774 = vsub.s32 0, %v773
  %v775 = vsel %vm769, %v774, %v773
  %vm776 = vcmp.lt.s32.totalorder %v760, 0
  %v777 = vsub.s32 0, %v760
  %v778 = vsel %vm776, %v777, %v760
  %v779 = vshrl.u32 %v778, 4
  %v780 = vand.u32 %v778, 15
  %v781 = vsub.s32 0, %v780
  %v782 = vsel %vm776, %v781, %v780
  %vm783 = vcmp.lt.s32.totalorder %v761, 0
  %v784 = vsub.s32 0, %v761
  %v785 = vsel %vm783, %v784, %v761
  %v786 = vshrl.u32 %v785, 4
  %v787 = vand.u32 %v785, 15
  %v788 = vsub.s32 0, %v787
  %v789 = vsel %vm783, %v788, %v787
  %vm790 = vcmp.ne.s32.totalorder %v768, 0
  %vm791 = vcmp.ne.s32.totalorder %v775, 0
  %vm792 = vcmp.ne.s32.totalorder %v782, 0
  %vm793 = vcmp.ne.s32.totalorder %v789, 0
  %vm794 = vcmp.lt.s32.totalorder %v768, 0
  %vm795 = vcmp.lt.s32.totalorder %v775, 0
  %vm796 = vcmp.lt.s32.totalorder %v782, 0
  %vm797 = vcmp.lt.s32.totalorder %v789, 0
  %vm798 = vmand %vm794, %vm790
  %vm799 = vmand %vm795, %vm791
  %vm800 = vmand %vm796, %vm792
  %vm801 = vmand %vm797, %vm793
  %v802 = vadd.s32 %v768, 16
  %v803 = vadd.s32 %v775, 16
  %v804 = vadd.s32 %v782, 16
  %v805 = vadd.s32 %v789, 16
  %v806 = vsel %vm798, %v802, %v768
  %v807 = vsel %vm799, %v803, %v775
  %v808 = vsel %vm800, %v804, %v782
  %v809 = vsel %vm801, %v805, %v789
  %s810 = sld [smem:[#allocation3]]
  %v811 = vstv %s810
  %vm812 = vcmp.lt.s32.totalorder %v806, %v811
  %vm813 = vcmp.lt.s32.totalorder %v807, %v811
  %vm814 = vcmp.lt.s32.totalorder %v808, %v811
  %vm815 = vcmp.lt.s32.totalorder %v809, %v811
  %v816 = vsel %vm812, 1, 0
  %v817 = vsel %vm813, 1, 0
  %v818 = vsel %vm814, 1, 0
  %v819 = vsel %vm815, 1, 0
  %vm820 = vcmp.eq.s32.totalorder %v816, 1
  %vm821 = vcmp.eq.s32.totalorder %v817, 1
  %vm822 = vcmp.eq.s32.totalorder %v818, 1
  %vm823 = vcmp.eq.s32.totalorder %v819, 1
  %v824 = vsel %vm820, %v747, 0.0
  %v825 = vsel %vm821, %v748, 0.0
  %v826 = vsel %vm822, %v749, 0.0
  %v827 = vsel %vm823, %v750, 0.0
  %828 = vst [vmem:[%s10] sm:$0xff] %v824
  %829 = vst [vmem:[%s10 + $0x8] sm:$0xff] %v825
  %830 = vst [vmem:[%s10 + $0x10] sm:$0xff] %v826
  %831 = vst [vmem:[%s10 + $0x18] sm:$0xff] %v827
  // Predicated region
  $region38: #{moge_forward.1} parent=0 // pred_check
    _
  $region39: #{moge_forward.1} parent=0 // pred_check_branch
    %833 = sbr.rel (0) target = $region41
  $region40: #{moge_forward.1} parent=0 // pred_region
    _
  $region41: #{moge_forward.1} parent=0 // pred_fallthru
    _
  // Predicated region
  $region42: #{moge_forward.1} parent=0 // pred_check
    _
  $region43: #{moge_forward.1} parent=0 // pred_check_branch
    %835 = sbr.rel (0) target = $region45
  $region44: #{moge_forward.1} parent=0 // pred_region
    _
  $region45: #{moge_forward.1} parent=0 // pred_fallthru
    _

</llo_original>
